<compile_context>
chip_gen: v7x
topology: tpu7x:2x2x1
jax: 0.10.0
libtpu: 0.0.40
codegen_flags: <defaults>
</compile_context>

<pallas_src>
import functools
import math

import jax
import jax.numpy as jnp
from jax.experimental import pallas as pl
from jax.experimental.pallas import tpu as pltpu

HIDDEN = 256
_VMEM_BUDGET = 24 * 1024 * 1024       # per-step working-set target (all gens)
_W1_RESIDENT_CAP = 12 * 1024 * 1024   # max VMEM spent on the resident W1 copy


def _ceil_div(a, b):
    return -(-a // b)


def _round_up(x, m):
    return _ceil_div(x, m) * m


def _predict_kernel(x_ref, w1_ref, b1_ref, w2_ref, b2_ref, o_ref, acc_ref, *,
                    tk, num_k, d_valid, w1_resident, mask_k):
    """Grid = (batch tiles [parallel], K tiles over embedding dim [arbitrary])."""
    k = pl.program_id(1)

    @pl.when(k == 0)
    def _init():
        # Start the accumulator at the broadcast Linear1 bias: removes a
        # full-tile VPU add from the finalize epilogue.
        acc_ref[...] = jnp.broadcast_to(b1_ref[...], acc_ref.shape)

    # x arrives in its native dtype; cast the tile to bf16 here (VPU cast is
    # hidden under the DMA of the next tile).
    x_tile = x_ref[...]
    if mask_k:
        # The last K tile can hang off the end of the (unpadded) x array: zero
        # the out-of-range columns so they cannot corrupt the reduction.
        col = jax.lax.broadcasted_iota(jnp.int32, x_tile.shape, 1) + k * tk
        x_tile = jnp.where(col < d_valid, x_tile, 0)
    x_bf = x_tile.astype(jnp.bfloat16)

    if w1_resident and num_k > 1:
        off = pl.multiple_of(k * tk, tk)
        w_slab = w1_ref[pl.ds(off, tk), :]          # slice the resident W1 copy
    else:
        w_slab = w1_ref[...]                        # single block / streamed slab

    # Linear1 partial product on the MXU: bf16 inputs, f32 accumulation.
    acc_ref[...] += jnp.dot(x_bf, w_slab, preferred_element_type=jnp.float32)

    @pl.when(k == num_k - 1)
    def _finalize():
        h = jax.nn.sigmoid(acc_ref[...])            # (tb, 256) f32
        # TODO(synk): Dropout(p=0.5) is eval-mode identity here; training mode
        # would need pltpu.prng_seed + pltpu.stateful_bernoulli and 2x rescale.
        # Linear2 (256 -> 1): contract the 256 axis of the lane-dense w2 row
        # against h's 256 axis on the MXU -> a lane-dense (1, tb) row directly
        # (no full-tile XLU transpose, no padded (256, 1) w2 column).
        row = jax.lax.dot_general(w2_ref[...], h, (((1,), (1,)), ((), ())),
                                  preferred_element_type=jnp.float32)
        o_ref[0] = (row + b2_ref[0]).astype(o_ref.dtype)   # lane-dense store


def _choose_tiling(B, D, x_itemsize, max_tb):
    # ---- batch tile: multiple of 128 (or the whole batch); split into >= 2
    # tiles when possible so v7x's second TensorCore gets a share.
    if B <= 256:
        tb = B
    else:
        tb = min(max_tb, _round_up(B, 128))
        if _ceil_div(B, tb) < 2:
            tb = max(128, _round_up(_ceil_div(B, 2), 128))
    num_b = _ceil_div(B, tb)

    def n_x_bufs(steps):
        # 3-deep x buffering helps hide DMA issue latency (v7x); only worth it
        # when there is more than one step in flight.
        return 3 if steps >= 3 else 2

    def fits(tk_, w1_rows, nbuf):
        need = (nbuf * tb * tk_ * x_itemsize        # x tiles (native dtype)
                + 2 * w1_rows * HIDDEN * 2          # W1 (bf16, double-buffered)
                + tb * HIDDEN * 4                   # f32 accumulator scratch
                + 256 * 1024)                       # b1 / w2 / out / slack
        return need <= _VMEM_BUDGET

    # ---- preferred: one full-D block (x tile and W1 both resident per step,
    # no padding / masking needed anywhere).
    nbuf = n_x_bufs(num_b)
    if 2 * D * HIDDEN * 2 <= _W1_RESIDENT_CAP and fits(D, D, nbuf):
        return dict(tb=tb, num_b=num_b, tk=D, num_k=1, d_pad=D,
                    w1_resident=True, n_x_bufs=nbuf)

    # ---- K-tiled x; keep W1 resident (fetched once) whenever it fits.
    for tk in (2048, 1024, 512, 256, 128):
        if tk >= D:
            continue
        num_k = _ceil_div(D, tk)
        d_pad = num_k * tk
        w1_resident = 2 * d_pad * HIDDEN * 2 <= _W1_RESIDENT_CAP
        w1_rows = d_pad if w1_resident else tk
        nbuf = n_x_bufs(num_b * num_k)
        if fits(tk, w1_rows, nbuf):
            return dict(tb=tb, num_b=num_b, tk=tk, num_k=num_k, d_pad=d_pad,
                        w1_resident=w1_resident, n_x_bufs=nbuf)

    # ---- last resort (gigantic D): small streamed tiles always fit.
    tk = 128
    num_k = _ceil_div(D, tk)
    return dict(tb=tb, num_b=num_b, tk=tk, num_k=num_k, d_pad=num_k * tk,
                w1_resident=False, n_x_bufs=2)


def predict_layer(x, w1, b1, w2, b2, *, training=False, max_tb=1024,
                  tiling_override=None):
    """PredictLayer forward: x (B, D) -> (B, 1).

    Weights use (in_features, out_features) layout: w1 (D, 256), b1 (256,),
    w2 (256, 1), b2 (1,).
    """
    if training:
        # TODO(synk): training-mode dropout (RNG mask + 2x rescale) not implemented.
        raise NotImplementedError("PredictLayer Pallas kernel is eval-mode only.")

    B, D = x.shape
    assert w1.shape == (D, HIDDEN) and b1.shape == (HIDDEN,)
    assert w2.shape == (HIDDEN, 1) and b2.shape == (1,)

    x_itemsize = jnp.dtype(x.dtype).itemsize
    if tiling_override is None:
        cfg = _choose_tiling(B, D, x_itemsize, max_tb)
    else:  # (tb, tk, w1_resident) — used by tests to exercise all code paths
        tb_o, tk_o, res_o = tiling_override
        nb_o, nk_o = _ceil_div(B, tb_o), _ceil_div(D, tk_o)
        cfg = dict(tb=tb_o, num_b=nb_o, tk=tk_o, num_k=nk_o, d_pad=nk_o * tk_o,
                   w1_resident=res_o, n_x_bufs=3 if nb_o * nk_o >= 3 else 2)

    tb, num_b = cfg["tb"], cfg["num_b"]
    tk, num_k, d_pad = cfg["tk"], cfg["num_k"], cfg["d_pad"]
    w1_resident = cfg["w1_resident"]
    mask_k = (d_pad != D)

    # Weight prep is weight-sized only (cheap); under jit with constant weights
    # XLA hoists these casts across calls.  x is passed through untouched —
    # no wrapper-side astype / pad copy of the activation.
    w1_c = w1.astype(jnp.bfloat16)
    if d_pad != D:
        w1_c = jnp.pad(w1_c, ((0, d_pad - D), (0, 0)))  # zero rows: exact no-op in the reduction
    b1_row = b1.reshape(1, HIDDEN).astype(jnp.float32)
    w2_row = w2.reshape(1, HIDDEN).astype(jnp.float32)  # lane-dense Linear2 weights
    b2_smem = b2.reshape(1).astype(jnp.float32)

    x_pipeline = {}
    if cfg["n_x_bufs"] > 2:
        x_pipeline = dict(pipeline_mode=pl.Buffered(cfg["n_x_bufs"]))

    if w1_resident:
        w1_spec = pl.BlockSpec((d_pad, HIDDEN), lambda i, k: (0, 0))   # fetched once
    else:
        w1_spec = pl.BlockSpec((tk, HIDDEN), lambda i, k: (k, 0))      # streamed (huge D)

    kernel = functools.partial(_predict_kernel, tk=tk, num_k=num_k, d_valid=D,
                               w1_resident=w1_resident, mask_k=mask_k)

    out = pl.pallas_call(
        kernel,
        out_shape=jax.ShapeDtypeStruct((num_b, 1, tb), jnp.float32),
        grid_spec=pltpu.PrefetchScalarGridSpec(
            num_scalar_prefetch=0,
            grid=(num_b, num_k),
            in_specs=[
                pl.BlockSpec((tb, tk), lambda i, k: (i, k), **x_pipeline),  # x tile
                w1_spec,                                                    # W1
                pl.BlockSpec((1, HIDDEN), lambda i, k: (0, 0)),             # b1 row (resident)
                pl.BlockSpec((1, HIDDEN), lambda i, k: (0, 0)),             # w2 row (resident)
                pl.BlockSpec(memory_space=pltpu.MemorySpace.SMEM),          # b2 scalar
            ],
            out_specs=pl.BlockSpec((1, 1, tb), lambda i, k: (i, 0, 0)),
            scratch_shapes=[pltpu.VMEM((tb, HIDDEN), jnp.float32)],
        ),
        compiler_params=pltpu.CompilerParams(
            dimension_semantics=("parallel", "arbitrary"),
            vmem_limit_bytes=32 * 1024 * 1024),
    )(x, w1_c, b1_row, w2_row, b2_smem)

    return out.reshape(num_b * tb, 1)[:B]


def init_params(key, embedding_dim):
    """Deterministic init mimicking nn.Linear's U(-1/sqrt(fan_in), 1/sqrt(fan_in))."""
    k1, k2, k3, k4 = jax.random.split(key, 4)
    bound1 = 1.0 / math.sqrt(embedding_dim)
    bound2 = 1.0 / math.sqrt(HIDDEN)
    w1 = jax.random.uniform(k1, (embedding_dim, HIDDEN), jnp.float32,
                            minval=-bound1, maxval=bound1)
    b1 = jax.random.uniform(k2, (HIDDEN,), jnp.float32,
                            minval=-bound1, maxval=bound1)
    w2 = jax.random.uniform(k3, (HIDDEN, 1), jnp.float32,
                            minval=-bound2, maxval=bound2)
    b2 = jax.random.uniform(k4, (1,), jnp.float32,
                            minval=-bound2, maxval=bound2)
    return w1, b1, w2, b2


if __name__ == "__main__":
    key = jax.random.PRNGKey(0)
    kx, kp = jax.random.split(key)

    def reference(x, w1, b1, w2, b2):
        # Matches the kernel's math: bf16 x/W1 streaming, f32 accumulation,
        # f32 Linear2.  (Dropout p=0.5 is identity in eval mode.)
        h = jax.nn.sigmoid(
            jnp.dot(x.astype(jnp.bfloat16), w1.astype(jnp.bfloat16),
                    preferred_element_type=jnp.float32) + b1)
        return h @ w2.astype(jnp.float32) + b2

    # 1) Default config: single full-D resident block.
    B, D = 8, 32
    x = jax.random.normal(kx, (B, D), jnp.float32)
    w1, b1, w2, b2 = init_params(kp, D)
    out = jax.block_until_ready(predict_layer(x, w1, b1, w2, b2))
    assert out.shape == (B, 1)
    assert jnp.allclose(out, reference(x, w1, b1, w2, b2), atol=2e-3, rtol=2e-3)
    # Full-f32 module semantics; loose tolerance covers the bf16 streaming.
    ref_f32 = jax.nn.sigmoid(x @ w1 + b1) @ w2 + b2
    assert jnp.allclose(out, ref_f32, atol=5e-2, rtol=5e-2)

    # 2) K-tiled paths (resident + streamed W1, ragged D -> in-kernel mask,
    #    3-deep x buffering), still at small shapes.
    B2, D2 = 16, 300
    x2 = jax.random.normal(kx, (B2, D2), jnp.float32)
    w1b, b1b, w2b, b2b = init_params(jax.random.fold_in(kp, 1), D2)
    for resident in (True, False):
        out2 = jax.block_until_ready(
            predict_layer(x2, w1b, b1b, w2b, b2b,
                          tiling_override=(B2, 128, resident)))
        assert out2.shape == (B2, 1)
        assert jnp.allclose(out2, reference(x2, w1b, b1b, w2b, b2b),
                            atol=2e-3, rtol=2e-3)

    print("KERNEL_OK")
</pallas_src>

<mosaic_0001>
module attributes {stable_mosaic.version = 11 : i64} {
  func.func @_predict_kernel(%arg0: i32, %arg1: i32, %arg2: memref<8x32xf32, #tpu.memory_space<vmem>>, %arg3: memref<32x256xbf16, #tpu.memory_space<vmem>>, %arg4: memref<1x256xf32, #tpu.memory_space<vmem>>, %arg5: memref<1x256xf32, #tpu.memory_space<vmem>>, %arg6: memref<1xf32, #tpu.memory_space<smem>>, %arg7: memref<1x1x8xf32, #tpu.memory_space<vmem>>, %arg8: memref<8x256xf32, #tpu.memory_space<vmem>>) attributes {dimension_semantics = [#tpu.dimension_semantics<parallel>, #tpu.dimension_semantics<arbitrary>], iteration_bounds = array<i64: 1, 1>, scalar_prefetch = 0 : i64, scratch_operands = 1 : i64, tpu.core_type = #tpu.core_type<tc>, window_params = [{transform_indices = @transform_0, window_bounds = array<i64: 8, 32>}, {pipeline_mode = #tpu.pipeline_mode<synchronous>, transform_indices = @transform_1, window_bounds = array<i64: 32, 256>}, {pipeline_mode = #tpu.pipeline_mode<synchronous>, transform_indices = @transform_2, window_bounds = array<i64: 1, 256>}, {pipeline_mode = #tpu.pipeline_mode<synchronous>, transform_indices = @transform_3, window_bounds = array<i64: 1, 256>}, {transform_indices = @transform_4, window_bounds = array<i64: 1>}, {transform_indices = @transform_5, window_bounds = array<i64: 1, 1, 8>}]} {
    %c0_i32 = arith.constant 0 : i32
    %0 = arith.cmpi eq, %arg1, %c0_i32 : i32
    %1 = arith.extui %0 : i1 to i32
    %c0_i32_0 = arith.constant 0 : i32
    %2 = arith.cmpi ne, %1, %c0_i32_0 : i32
    scf.if %2 {
      %c0_10 = arith.constant 0 : index
      %c0_11 = arith.constant 0 : index
      %13 = vector.load %arg4[%c0_10, %c0_11] : memref<1x256xf32, #tpu.memory_space<vmem>>, vector<1x256xf32>
      %14 = vector.shape_cast %13 : vector<1x256xf32> to vector<1x256xf32>
      %15 = vector.broadcast %14 : vector<1x256xf32> to vector<8x256xf32>
      %c0_12 = arith.constant 0 : index
      %c0_13 = arith.constant 0 : index
      %16 = vector.load %arg8[%c0_12, %c0_13] : memref<8x256xf32, #tpu.memory_space<vmem>>, vector<8x256xf32>
      tpu.vector_store %arg8[%c0_12, %c0_13], %15 {strides = array<i32>} : memref<8x256xf32, #tpu.memory_space<vmem>>, vector<8x256xf32>,
    } else {
    }
    %c0 = arith.constant 0 : index
    %c0_1 = arith.constant 0 : index
    %3 = vector.load %arg2[%c0, %c0_1] : memref<8x32xf32, #tpu.memory_space<vmem>>, vector<8x32xf32>
    %4 = arith.truncf %3 : vector<8x32xf32> to vector<8x32xbf16>
    %c0_2 = arith.constant 0 : index
    %c0_3 = arith.constant 0 : index
    %5 = vector.load %arg3[%c0_2, %c0_3] : memref<32x256xbf16, #tpu.memory_space<vmem>>, vector<32x256xbf16>
    %c0_4 = arith.constant 0 : index
    %c0_5 = arith.constant 0 : index
    %6 = vector.load %arg8[%c0_4, %c0_5] : memref<8x256xf32, #tpu.memory_space<vmem>>, vector<8x256xf32>
    %cst = arith.constant dense<0.000000e+00> : vector<8x256xf32>
    %7 = tpu.matmul %4, %5, %cst {dimension_numbers = #tpu.dot_dimension_numbers<[1], [0], [0], [1], [0, 0, 1, 1], [], []>} : vector<8x32xbf16>, vector<32x256xbf16>, vector<8x256xf32> -> vector<8x256xf32>
    %8 = arith.addf %6, %7 : vector<8x256xf32>
    %c0_6 = arith.constant 0 : index
    %c0_7 = arith.constant 0 : index
    %9 = vector.load %arg8[%c0_6, %c0_7] : memref<8x256xf32, #tpu.memory_space<vmem>>, vector<8x256xf32>
    tpu.vector_store %arg8[%c0_6, %c0_7], %8 {strides = array<i32>} : memref<8x256xf32, #tpu.memory_space<vmem>>, vector<8x256xf32>,
    %c0_i32_8 = arith.constant 0 : i32
    %10 = arith.cmpi eq, %arg1, %c0_i32_8 : i32
    %11 = arith.extui %10 : i1 to i32
    %c0_i32_9 = arith.constant 0 : i32
    %12 = arith.cmpi ne, %11, %c0_i32_9 : i32
    scf.if %12 {
      %c0_10 = arith.constant 0 : index
      %c0_11 = arith.constant 0 : index
      %13 = vector.load %arg8[%c0_10, %c0_11] : memref<8x256xf32, #tpu.memory_space<vmem>>, vector<8x256xf32>
      %14 = arith.negf %13 : vector<8x256xf32>
      %15 = math.exp %14 : vector<8x256xf32>
      %cst_12 = arith.constant 1.000000e+00 : f32
      %16 = vector.broadcast %cst_12 : f32 to vector<8x256xf32>
      %17 = arith.addf %16, %15 : vector<8x256xf32>
      %18 = arith.divf %16, %17 : vector<8x256xf32>
      %c0_13 = arith.constant 0 : index
      %c0_14 = arith.constant 0 : index
      %19 = vector.load %arg5[%c0_13, %c0_14] : memref<1x256xf32, #tpu.memory_space<vmem>>, vector<1x256xf32>
      %cst_15 = arith.constant dense<0.000000e+00> : vector<1x8xf32>
      %20 = tpu.matmul %19, %18, %cst_15 {dimension_numbers = #tpu.dot_dimension_numbers<[1], [1], [0], [0], [0, 0, 1, 0], [], []>} : vector<1x256xf32>, vector<8x256xf32>, vector<1x8xf32> -> vector<1x8xf32>
      %c0_16 = arith.constant 0 : index
      %21 = memref.load %arg6[%c0_16] : memref<1xf32, #tpu.memory_space<smem>>
      %22 = vector.broadcast %21 : f32 to vector<1x8xf32>
      %23 = arith.addf %20, %22 : vector<1x8xf32>
      %c0_17 = arith.constant 0 : index
      %c0_18 = arith.constant 0 : index
      %c0_19 = arith.constant 0 : index
      %24 = vector.load %arg7[%c0_17, %c0_18, %c0_19] : memref<1x1x8xf32, #tpu.memory_space<vmem>>, vector<1x1x8xf32>
      %25 = vector.shape_cast %24 : vector<1x1x8xf32> to vector<1x8xf32>
      %26 = vector.shape_cast %23 : vector<1x8xf32> to vector<1x1x8xf32>
      tpu.vector_store %arg7[%c0_17, %c0_18, %c0_19], %26 {strides = array<i32>} : memref<1x1x8xf32, #tpu.memory_space<vmem>>, vector<1x1x8xf32>,
    } else {
    }
    return
  }
  func.func @transform_0(%arg0: i32, %arg1: i32) -> (i32, i32) {
    %c0_i32 = arith.constant 0 : i32
    return %arg0, %arg1 : i32, i32
  }
  func.func @transform_1(%arg0: i32, %arg1: i32) -> (i32, i32) {
    %c0_i32 = arith.constant 0 : i32
    %c0_i32_0 = arith.constant 0 : i32
    %c0_i32_1 = arith.constant 0 : i32
    return %c0_i32, %c0_i32_0 : i32, i32
  }
  func.func @transform_2(%arg0: i32, %arg1: i32) -> (i32, i32) {
    %c0_i32 = arith.constant 0 : i32
    %c0_i32_0 = arith.constant 0 : i32
    %c0_i32_1 = arith.constant 0 : i32
    return %c0_i32, %c0_i32_0 : i32, i32
  }
  func.func @transform_3(%arg0: i32, %arg1: i32) -> (i32, i32) {
    %c0_i32 = arith.constant 0 : i32
    %c0_i32_0 = arith.constant 0 : i32
    %c0_i32_1 = arith.constant 0 : i32
    return %c0_i32, %c0_i32_0 : i32, i32
  }
  func.func @transform_4(%arg0: i32, %arg1: i32) -> i32 {
    %c0_i32 = arith.constant 0 : i32
    %c0_i32_0 = arith.constant 0 : i32
    return %c0_i32 : i32
  }
  func.func @transform_5(%arg0: i32, %arg1: i32) -> (i32, i32, i32) {
    %c0_i32 = arith.constant 0 : i32
    %c0_i32_0 = arith.constant 0 : i32
    %c0_i32_1 = arith.constant 0 : i32
    return %arg0, %c0_i32, %c0_i32_0 : i32, i32, i32
  }
}

</mosaic_0001>

<llo_original>
// kernel: tpu_custom_call.1
$region0: #{tpu_custom_call.1}
  #allocation0 [shape = 'u32[]', space=smem, size = 0x4, offset = 0x4, fixed_abs, tag = 'smem constant byte address 0x4 - core index']
  #allocation1 [shape = 'u32[144,128]{1,0:T(1,128)}', space=vmem, size = 0x12000, scoped, tag = 'internal scratch']
  #allocation2 [shape = 'f32[8,256]{1,0:T(8,128)}', space=vmem, size = 0x2000, scoped, tag = 'scratch operand']
  #allocation3 [shape = 'f32[1]{0:T(128)S(6)}', space=smem, size = 0x200, scoped, tag = 'scoped memory for tpu_custom_call.1']
  %s0 = inlined_call_operand.hbm [shape: f32[8,32], index: 0, kind: input, shape index: {}]
  %s1 = inlined_call_operand.hbm [shape: bf16[32,256], index: 1, kind: input, shape index: {}]
  %s2 = inlined_call_operand.vmem [shape: f32[1,256], index: 2, kind: input, shape index: {}]
  %s3 = inlined_call_operand.vmem [shape: f32[1,256], index: 3, kind: input, shape index: {}]
  %s4 = inlined_call_operand.<no memory space> [shape: f32[1], index: 4, kind: input, shape index: {}]
  %s5 = inlined_call_operand.hbm [shape: f32[1,1,8], index: 5, kind: output, shape index: {}]
  %s6 = sld [smem:[#allocation0]]
  $region46: #{tpu_custom_call.1} parent=0
    _
  %s8 = ssub.s32 1, %s6
  %s9 = scalar_select 0, %s8, %s6
  %10 = sst [smem:[#allocation3]] %s4
  $region1: #{tpu_custom_call.1} parent=0
    #allocation4 [shape = 'u8[4096]{0}', space=vmem, size = 0x1000, scoped, tag = 'input window, operand 0, single buffered']
    #allocation5 [shape = 's32[1]{0}', space=sflag, size = 0x4, scoped, tag = 'scoped memory for tpu_custom_call.1']
    #allocation6 [shape = 's32[1]{0}', space=sflag, size = 0x4, scoped, tag = 'scoped memory for tpu_custom_call.1']
    #allocation7 [shape = 'u8[16384]{0}', space=vmem, size = 0x4000, scoped, tag = 'input window, operand 1, single buffered']
    #allocation8 [shape = 's32[1]{0}', space=sflag, size = 0x4, scoped, tag = 'scoped memory for tpu_custom_call.1']
    #allocation9 [shape = 'u8[512]{0}', space=vmem, size = 0x400, scoped, tag = 'output window, operand 0, single buffered']
    %11 = vsyncpa [#allocation5], 0
    %12 = vsyncpa [#allocation8], 0
    %13 = vsyncpa [#allocation6], 0
    // Predicated region
    $region2: #{tpu_custom_call.1} parent=1 // pred_check
      _
    $region3: #{tpu_custom_call.1} parent=1 // pred_check_branch
      %15 = sbr.rel (0) target = $region5
    $region4: #{tpu_custom_call.1} parent=1 // pred_region
      %s17 = ssub.s32 128, 128
      %18 = vsyncadd [#allocation5], %s17
      %s20 = sshll.u32 [#allocation4], 4
      %s21 = int_to_ptr.vmem [resolvable:$true] %s20
      %23 = dma.hbm_to_vmem [thread:$0]  %s0, 128, %s21, [#allocation5]
    $region5: #{tpu_custom_call.1} parent=1 // pred_fallthru
      _
    // Predicated region
    $region6: #{tpu_custom_call.1} parent=1 // pred_check
      _
    $region7: #{tpu_custom_call.1} parent=1 // pred_check_branch
      %25 = sbr.rel (0) target = $region9
    $region8: #{tpu_custom_call.1} parent=1 // pred_region
      %s27 = ssub.s32 512, 512
      %28 = vsyncadd [#allocation8], %s27
      %s29 = sshll.u32 [#allocation7], 4
      %s30 = int_to_ptr.vmem [resolvable:$true] %s29
      %35 = dma.hbm_to_vmem [thread:$0]  %s1, 512, %s30, [#allocation8], 128, 128, 8
    $region9: #{tpu_custom_call.1} parent=1 // pred_fallthru
      _
    // Predicated region
    $region10: #{tpu_custom_call.1} parent=1 // pred_check
      _
    $region11: #{tpu_custom_call.1} parent=1 // pred_check_branch
      %37 = sbr.rel (0) target = $region13
    $region12: #{tpu_custom_call.1} parent=1 // pred_region
      _
    $region13: #{tpu_custom_call.1} parent=1 // pred_fallthru
      _
    // Predicated region
    $region14: #{tpu_custom_call.1} parent=1 // pred_check
      _
    $region15: #{tpu_custom_call.1} parent=1 // pred_check_branch
      %39 = sbr.rel (0) target = $region17
    $region16: #{tpu_custom_call.1} parent=1 // pred_region
      _
    $region17: #{tpu_custom_call.1} parent=1 // pred_fallthru
      _
    // Predicated region
    $region18: #{tpu_custom_call.1} parent=1 // pred_check
      _
    $region19: #{tpu_custom_call.1} parent=1 // pred_check_branch
      %41 = sbr.rel (0) target = $region21
    $region20: #{tpu_custom_call.1} parent=1 // pred_region
      _
    $region21: #{tpu_custom_call.1} parent=1 // pred_fallthru
      _
    // Predicated region
    $region22: #{tpu_custom_call.1} parent=1 // pred_check
      _
    $region23: #{tpu_custom_call.1} parent=1 // pred_check_branch
      %43 = sbr.rel (0) target = $region25
    $region24: #{tpu_custom_call.1} parent=1 // pred_region
      %44 = dma.done [#allocation5], 128
    $region25: #{tpu_custom_call.1} parent=1 // pred_fallthru
      _
    // Predicated region
    $region26: #{tpu_custom_call.1} parent=1 // pred_check
      _
    $region27: #{tpu_custom_call.1} parent=1 // pred_check_branch
      %46 = sbr.rel (0) target = $region29
    $region28: #{tpu_custom_call.1} parent=1 // pred_region
      %47 = dma.done [#allocation8], 512
    $region29: #{tpu_custom_call.1} parent=1 // pred_fallthru
      _
    %p49 = scmp.eq.s32.totalorder 0, 0
    // Predicated region
    $region30: #{tpu_custom_call.1} parent=1 // pred_check
      %p50 = pneg %p49
    $region31: #{tpu_custom_call.1} parent=1 // pred_check_branch
      %52 = sbr.rel (%p50) target = $region33
    $region32: #{tpu_custom_call.1} parent=1 // pred_region
      %v53 = vld [vmem:[%s2] sm:$0x3]
      %v55 = vlaneseq
      %v56 = vshrl.u32 %v55, 7
      %v57 = vsub.s32 0, %v56
      %v58 = vrot.slane %v53, %v57
      %v59 = vlaneseq
      %v60 = vshrl.u32 %v59, 7
      %v61 = vsub.s32 1, %v60
      %v62 = vrot.slane %v53, %v61
      %65 = vst [vmem:[#allocation2] sm:$0xff] %v58
      %66 = vst [vmem:[#allocation2 + $0x8] sm:$0xff] %v62
    $region33: #{tpu_custom_call.1} parent=1 // pred_fallthru
      _
    %v67 = vld [vmem:[#allocation4] sm:$0xff]
    %v68 = vpack.c.bf16 %v67, %v67
    %v69 = vld [vmem:[#allocation7] sm:$0xff]
    %v70 = vld [vmem:[#allocation7 + $0x8] sm:$0xff]
    %v71 = vld [vmem:[#allocation7 + $0x10] sm:$0xff]
    %v72 = vld [vmem:[#allocation7 + $0x18] sm:$0xff]
    %v73 = vld [vmem:[#allocation2] sm:$0xff]
    %v74 = vld [vmem:[#allocation2 + $0x8] sm:$0xff]
    %v79 = vunpack.c.l.b16 %v69
    %v80 = vunpack.c.h.b16 %v69
    %v81 = vunpack.c.l.b16 %v70
    %v82 = vunpack.c.h.b16 %v70
    %v83 = vunpack.c.l.b16 %v71
    %v84 = vunpack.c.h.b16 %v71
    %v85 = vunpack.c.l.b16 %v72
    %v86 = vunpack.c.h.b16 %v72
    %v87 = vpack.c.b16 %v81, %v79
    %v88 = vpack.c.b16 %v82, %v80
    %v89 = vpack.c.b16 %v85, %v83
    %v90 = vpack.c.b16 %v86, %v84
    %vm95 = vcmask 261120
    %v97 = vsel %vm95, %v68, 0
    %99 = vmatprep.subr.bf16.mxu0 %v88
    %100 = vmatpush1.bf16.msra.mxu0 %v87
    %101 = vmatprep.subr.bf16.mxu0 %v90
    %102 = vmatpush1.bf16.msra.mxu0 %v89
    %103 = vmatprep.subr.bf16.mxu0 0
    %104 = vmatpush1.bf16.msra.mxu0 0
    %105 = vmatprep.subr.bf16.mxu0 0
    %106 = vmatpush1.bf16.msra.mxu0 0
    %107 = vmatprep.subr.bf16.mxu0 0
    %108 = vmatpush1.bf16.msra.mxu0 0
    %109 = vmatprep.subr.bf16.mxu0 0
    %110 = vmatpush1.bf16.msra.mxu0 0
    %111 = vmatprep.subr.bf16.mxu0 0
    %112 = vmatpush1.bf16.msra.mxu0 0
    %113 = vmatprep.subr.bf16.mxu0 0
    %114 = vmatpush1.bf16.msra.mxu0 0
    %115 = vmatprep.subr.bf16.mxu0 0
    %116 = vmatpush1.bf16.msra.mxu0 0
    %117 = vmatprep.subr.bf16.mxu0 0
    %118 = vmatpush1.bf16.msra.mxu0 0
    %119 = vmatprep.subr.bf16.mxu0 0
    %120 = vmatpush1.bf16.msra.mxu0 0
    %121 = vmatprep.subr.bf16.mxu0 0
    %122 = vmatpush1.bf16.msra.mxu0 0
    %123 = vmatprep.subr.bf16.mxu0 0
    %124 = vmatpush1.bf16.msra.mxu0 0
    %125 = vmatprep.subr.bf16.mxu0 0
    %126 = vmatpush1.bf16.msra.mxu0 0
    %127 = vmatprep.subr.bf16.mxu0 0
    %128 = vmatpush1.bf16.msra.mxu0 0
    %129 = vmatprep.subr.bf16.mxu0 0
    %130 = vmatpush1.bf16.msra.mxu0 0
    %131 = vmatprep.mubr.bf16.mxu0 0
    %132 = vmatmul.mubr.bf16.gmra.mrb[0].mxu0 %v97
    %v133 = vpop.f32.mrb[0].mxu0
    %v134 = vadd.f32 0.0, %v133
    %v135 = vpop.f32.mrb[0].mxu0
    %v136 = vadd.f32 0.0, %v135
    %v137 = vpop.f32.mrb[0].mxu0
    %v138 = vpop.f32.mrb[0].mxu0
    %139 = vdwg.mxu0
    %v140 = vadd.f32 %v73, %v134
    %v141 = vadd.f32 %v74, %v136
    %142 = vst [vmem:[#allocation2] sm:$0xff] %v140
    %143 = vst [vmem:[#allocation2 + $0x8] sm:$0xff] %v141
    // Predicated region
    $region34: #{tpu_custom_call.1} parent=1 // pred_check
      %p144 = pneg %p49
    $region35: #{tpu_custom_call.1} parent=1 // pred_check_branch
      %146 = sbr.rel (%p144) target = $region37
    $region36: #{tpu_custom_call.1} parent=1 // pred_region
      %v147 = vld [vmem:[#allocation2] sm:$0xff]
      %v148 = vld [vmem:[#allocation2 + $0x8] sm:$0xff]
      %v149 = vxor.u32 %v147, 2147483648
      %v150 = vxor.u32 %v148, 2147483648
      %v151 = vmul.f32 %v149, 1.442695
      %v152 = vpow.pop %v151
      %v153 = vmul.f32 %v150, 1.442695
      %v154 = vpow.pop %v153
      %v155 = vadd.f32 %v152, 1.0
      %v156 = vadd.f32 %v154, 1.0
      %v157 = vrcp.pop %v155
      %v158 = vmul.f32 1.0, %v157
      %v159 = vrcp.pop %v156
      %v160 = vmul.f32 1.0, %v159
      %v161 = vld [vmem:[%s3] sm:$0x3]
      %s162 = sld [smem:[#allocation3]]
      %v163 = vstv %s162
      %v165 = vlaneseq
      %v166 = vshrl.u32 %v165, 7
      %v167 = vsub.s32 0, %v166
      %v168 = vrot.slane %v161, %v167
      %v169 = vlaneseq
      %v170 = vshrl.u32 %v169, 7
      %v171 = vsub.s32 1, %v170
      %v172 = vrot.slane %v161, %v171
      %175 = vmatprep.subr.mxu0 %v160
      %176 = vmatpush1.xpose.msra.mxu0 %v158
      %177 = vmatprep.subr.mxu0 0.0
      %178 = vmatpush1.xpose.msra.mxu0 0.0
      %179 = vmatprep.subr.mxu0 0.0
      %180 = vmatpush1.xpose.msra.mxu0 0.0
      %181 = vmatprep.subr.mxu0 0.0
      %182 = vmatpush1.xpose.msra.mxu0 0.0
      %183 = vmatprep.subr.mxu0 0.0
      %184 = vmatpush1.xpose.msra.mxu0 0.0
      %185 = vmatprep.subr.mxu0 0.0
      %186 = vmatpush1.xpose.msra.mxu0 0.0
      %187 = vmatprep.subr.mxu0 0.0
      %188 = vmatpush1.xpose.msra.mxu0 0.0
      %189 = vmatprep.subr.mxu0 0.0
      %190 = vmatpush1.xpose.msra.mxu0 0.0
      %191 = vmatprep.subr.mxu0 0.0
      %192 = vmatpush1.xpose.msra.mxu0 0.0
      %193 = vmatprep.subr.mxu0 0.0
      %194 = vmatpush1.xpose.msra.mxu0 0.0
      %195 = vmatprep.subr.mxu0 0.0
      %196 = vmatpush1.xpose.msra.mxu0 0.0
      %197 = vmatprep.subr.mxu0 0.0
      %198 = vmatpush1.xpose.msra.mxu0 0.0
      %199 = vmatprep.subr.mxu0 0.0
      %200 = vmatpush1.xpose.msra.mxu0 0.0
      %201 = vmatprep.subr.mxu0 0.0
      %202 = vmatpush1.xpose.msra.mxu0 0.0
      %203 = vmatprep.subr.mxu0 0.0
      %204 = vmatpush1.xpose.msra.mxu0 0.0
      %205 = vmatprep.subr.mxu0 0.0
      %206 = vmatpush1.xpose.msra.mxu0 0.0
      %207 = vmatprep.subr.mxu0 0.0
      %208 = vmatpush1.xpose.msra.mxu0 0.0
      %209 = vmatprep.subr.mxu0 0.0
      %210 = vmatpush1.xpose.msra.mxu0 0.0
      %211 = vmatprep.subr.mxu0 0.0
      %212 = vmatpush1.xpose.msra.mxu0 0.0
      %213 = vmatprep.subr.mxu0 0.0
      %214 = vmatpush1.xpose.msra.mxu0 0.0
      %215 = vmatprep.subr.mxu0 0.0
      %216 = vmatpush1.xpose.msra.mxu0 0.0
      %217 = vmatprep.subr.mxu0 0.0
      %218 = vmatpush1.xpose.msra.mxu0 0.0
      %219 = vmatprep.subr.mxu0 0.0
      %220 = vmatpush1.xpose.msra.mxu0 0.0
      %221 = vmatprep.subr.mxu0 0.0
      %222 = vmatpush1.xpose.msra.mxu0 0.0
      %223 = vmatprep.subr.mxu0 0.0
      %224 = vmatpush1.xpose.msra.mxu0 0.0
      %225 = vmatprep.subr.mxu0 0.0
      %226 = vmatpush1.xpose.msra.mxu0 0.0
      %227 = vmatprep.subr.mxu0 0.0
      %228 = vmatpush1.xpose.msra.mxu0 0.0
      %229 = vmatprep.subr.mxu0 0.0
      %230 = vmatpush1.xpose.msra.mxu0 0.0
      %231 = vmatprep.subr.mxu0 0.0
      %232 = vmatpush1.xpose.msra.mxu0 0.0
      %233 = vmatprep.subr.mxu0 0.0
      %234 = vmatpush1.xpose.msra.mxu0 0.0
      %235 = vmatprep.subr.mxu0 0.0
      %236 = vmatpush1.xpose.msra.mxu0 0.0
      %237 = vmatprep.subr.mxu0 0.0
      %238 = vmatpush1.xpose.msra.mxu0 0.0
      %239 = vmatprep.mubr.f32.mxu0 %v172
      %240 = vmatmul.mubr.f32.gmra.mrb[0].mxu0 %v168
      %v241 = vpop.f32.mrb[0].mxu0
      %v242 = vadd.f32 %v163, %v241
      %v243 = vpop.f32.mrb[0].mxu0
      %244 = vdwg.mxu0
      %vm245 = vcmask 57344
      %246 = vst.msk [vmem:[#allocation9] sm:$0x1] %vm245, %v242
    $region37: #{tpu_custom_call.1} parent=1 // pred_fallthru
      _
    // Predicated region
    $region38: #{tpu_custom_call.1} parent=1 // pred_check
      _
    $region39: #{tpu_custom_call.1} parent=1 // pred_check_branch
      %248 = sbr.rel (0) target = $region41
    $region40: #{tpu_custom_call.1} parent=1 // pred_region
      %s250 = ssub.s32 16, 16
      %251 = vsyncadd [#allocation6], %s250
      %s253 = sshll.u32 [#allocation9], 4
      %s254 = int_to_ptr.vmem [resolvable:$true] %s253
      %256 = dma.vmem_to_hbm [thread:$0]  %s254, 16, %s5, [#allocation6]
    $region41: #{tpu_custom_call.1} parent=1 // pred_fallthru
      _
    // Predicated region
    $region42: #{tpu_custom_call.1} parent=1 // pred_check
      _
    $region43: #{tpu_custom_call.1} parent=1 // pred_check_branch
      %258 = sbr.rel (0) target = $region45
    $region44: #{tpu_custom_call.1} parent=1 // pred_region
      %259 = dma.done [#allocation6], 16
    $region45: #{tpu_custom_call.1} parent=1 // pred_fallthru
      _
    %260 = vsyncpa [#allocation5], 1
    %261 = vsyncpa [#allocation8], 1
    %262 = vsyncpa [#allocation6], 1

</llo_original>
